<compile_context>
chip_gen: v6e
topology: v6e:2x2x1
jax: 0.10.0
libtpu: 0.0.40
codegen_flags: <defaults>
</compile_context>

<pallas_src>
import functools
import math

import jax
import jax.numpy as jnp
from jax.experimental import pallas as pl
from jax.experimental.pallas import tpu as pltpu


def _round_up(x, m):
    return ((x + m - 1) // m) * m


# ----------------------- Pass 1: per-row sum of squares --------------------- #

def _row_sumsq_kernel(x_ref, acc_ref):
    t = pl.program_id(1)

    @pl.when(t == 0)
    def _():
        acc_ref[...] = jnp.zeros_like(acc_ref)

    x = x_ref[...].astype(jnp.float32)
    acc_ref[...] += jnp.sum(x * x, axis=-1, keepdims=True)


def _row_sumsq(x_pad, tb, tt):
    bp, tp = x_pad.shape
    return pl.pallas_call(
        _row_sumsq_kernel,
        out_shape=jax.ShapeDtypeStruct((bp, 1), jnp.float32),
        grid_spec=pltpu.PrefetchScalarGridSpec(
            num_scalar_prefetch=0,
            grid=(bp // tb, tp // tt),
            in_specs=[pl.BlockSpec((tb, tt), lambda i, t: (i, t))],
            out_specs=pl.BlockSpec((tb, 1), lambda i, t: (i, 0)),
        ),
        compiler_params=pltpu.CompilerParams(
            dimension_semantics=("parallel", "arbitrary"),
            vmem_limit_bytes=64 * 1024 * 1024,
        ),
    )(x_pad)


# ----------------------- Pass 2: gain + scaled add -------------------------- #

def _apply_noise_kernel(x_ref, n_ref, sumsq_ref, snr_ref, o_ref, *, inv_t):
    x = x_ref[...].astype(jnp.float32)
    noise = n_ref[...].astype(jnp.float32)

    rms = jnp.sqrt(sumsq_ref[...] * inv_t)                       # (TB, 1)
    # desired noise RMS: signal_rms / 10**(snr/20); noise already has RMS = 1
    gain = rms * jnp.exp(-snr_ref[...] * (math.log(10.0) / 20.0))  # (TB, 1)

    o_ref[...] = (x + gain * noise).astype(o_ref.dtype)


def _apply_noise(x_pad, noise_pad, sumsq, snr_pad, tb, tt, true_t):
    bp, tp = x_pad.shape
    return pl.pallas_call(
        functools.partial(_apply_noise_kernel, inv_t=1.0 / float(true_t)),
        out_shape=jax.ShapeDtypeStruct((bp, tp), x_pad.dtype),
        grid_spec=pltpu.PrefetchScalarGridSpec(
            num_scalar_prefetch=0,
            grid=(bp // tb, tp // tt),
            in_specs=[
                pl.BlockSpec((tb, tt), lambda i, t: (i, t)),   # x
                pl.BlockSpec((tb, tt), lambda i, t: (i, t)),   # noise
                pl.BlockSpec((tb, 1), lambda i, t: (i, 0)),    # sum(x^2) per row
                pl.BlockSpec((tb, 1), lambda i, t: (i, 0)),    # snr (dB) per row
            ],
            out_specs=pl.BlockSpec((tb, tt), lambda i, t: (i, t)),
        ),
        compiler_params=pltpu.CompilerParams(
            dimension_semantics=("parallel", "parallel"),
            vmem_limit_bytes=64 * 1024 * 1024,
        ),
    )(x_pad, noise_pad, sumsq, snr_pad)


# --------------------- colored-noise synthesis (glue) ----------------------- #
# Mirrors torch_audiomentations.AddColoredNoise._gen_noise.
# TODO(synk): rfft/irfft have no Pallas equivalent; noise synthesis stays in JAX
#             (vmapped over batch, run under the same jit as the kernels).

def _gen_colored_noise(key, f_decay, num_samples, sample_rate):
    white = jax.random.normal(key, (sample_rate,), dtype=jnp.float32)
    spec = jnp.fft.rfft(white)
    freqs = jnp.linspace(1.0, (sample_rate / 2.0) ** 0.5, spec.shape[0])
    mask = 1.0 / (freqs ** f_decay)
    noise = jnp.fft.irfft(spec * mask, n=sample_rate)            # (sample_rate,)
    noise = noise / jnp.sqrt(jnp.mean(noise * noise))            # RMS normalize
    reps = int(math.ceil(num_samples / sample_rate))
    return jnp.tile(noise, reps)[:num_samples]                   # (num_samples,)


# ------------------------------ forward (jitted) ---------------------------- #

def _forward(x, key, *, sample_rate, min_snr, max_snr, min_fd, max_fd):
    # x: (B, T); the unsqueeze(1)/squeeze(1) of the reference is pure glue.
    B, T = x.shape
    dtype = x.dtype

    # Tiling: lane-dense time tiles (multiple of 128, capped at 8192) and
    # batch tiles in multiples of 8.
    tt = min(_round_up(T, 128), 8192)
    bp8 = _round_up(B, 8)
    tb = bp8 if bp8 < 32 else 32
    bp = _round_up(B, tb)
    tp = _round_up(T, tt)

    k_snr, k_dec, k_noise = jax.random.split(key, 3)
    snr_db = jax.random.uniform(k_snr, (B,), minval=min_snr, maxval=max_snr,
                                dtype=jnp.float32)
    f_decay = jax.random.uniform(k_dec, (B,), minval=min_fd, maxval=max_fd,
                                 dtype=jnp.float32)
    noise_keys = jax.random.split(k_noise, B)
    noise = jax.vmap(_gen_colored_noise, in_axes=(0, 0, None, None))(
        noise_keys, f_decay, T, sample_rate)                     # (B, T), unit RMS
    noise = noise.astype(dtype)                                  # match x's HBM dtype

    # Pad to the tile grid (zeros contribute nothing to the reduction; padded
    # rows get rms = 0 -> gain = 0). No cast of x itself (keep its dtype).
    if bp != B or tp != T:
        x_pad = jnp.pad(x, ((0, bp - B), (0, tp - T)))
        noise_pad = jnp.pad(noise, ((0, bp - B), (0, tp - T)))
    else:
        x_pad, noise_pad = x, noise
    snr_pad = jnp.zeros((bp, 1), jnp.float32).at[:B, 0].set(snr_db)

    sumsq = _row_sumsq(x_pad, tb, tt)                            # (bp, 1) f32
    out_pad = _apply_noise(x_pad, noise_pad, sumsq, snr_pad, tb, tt, T)
    return out_pad[:B, :T]


# ------------------------------ module wrapper ------------------------------ #

class AddNoiseAugPallas:
    """Pallas equivalent of AddNoiseAug(sample_rate, min_snr_in_db, max_snr_in_db,
    min_f_decay, max_f_decay). Noise is always applied (p=1)."""

    def __init__(self, sample_rate, min_snr_in_db=3.0, max_snr_in_db=30.0,
                 min_f_decay=-2.0, max_f_decay=2.0):
        self._fwd = jax.jit(functools.partial(
            _forward,
            sample_rate=int(sample_rate),
            min_snr=float(min_snr_in_db), max_snr=float(max_snr_in_db),
            min_fd=float(min_f_decay), max_fd=float(max_f_decay)))

    def __call__(self, audio_waveform, key):
        return self._fwd(audio_waveform, key)


# ---------------------------------- main ------------------------------------ #

if __name__ == "__main__":
    key = jax.random.PRNGKey(0)
    k_x, k_aug = jax.random.split(key)

    B, T = 2, 256
    sample_rate = 128
    x = jax.random.normal(k_x, (B, T), dtype=jnp.float32)

    aug = AddNoiseAugPallas(sample_rate=sample_rate)
    out = aug(x, k_aug)
    out = jax.block_until_ready(out)

    assert out.shape == (B, T) and out.dtype == jnp.float32
    assert bool(jnp.all(jnp.isfinite(out)))
    # noise is actually added (gain > 0 for non-zero rows)
    assert bool(jnp.any(jnp.abs(out - x) > 0))
    print("KERNEL_OK")
</pallas_src>

<mosaic_0001>
module attributes {stable_mosaic.version = 11 : i64} {
  func.func @_row_sumsq_kernel(%arg0: i32, %arg1: i32, %arg2: memref<8x256xf32, #tpu.memory_space<vmem>>, %arg3: memref<8x1xf32, #tpu.memory_space<vmem>>) attributes {dimension_semantics = [#tpu.dimension_semantics<parallel>, #tpu.dimension_semantics<arbitrary>], iteration_bounds = array<i64: 1, 1>, scalar_prefetch = 0 : i64, scratch_operands = 0 : i64, tpu.core_type = #tpu.core_type<tc>, window_params = [{transform_indices = @transform_0, window_bounds = array<i64: 8, 256>}, {transform_indices = @transform_1, window_bounds = array<i64: 8, 1>}]} {
    %c0_i32 = arith.constant 0 : i32
    %0 = arith.cmpi eq, %arg1, %c0_i32 : i32
    %1 = arith.extui %0 : i1 to i32
    %c0_i32_0 = arith.constant 0 : i32
    %2 = arith.cmpi ne, %1, %c0_i32_0 : i32
    scf.if %2 {
      %cst_6 = arith.constant 0.000000e+00 : f32
      %10 = vector.broadcast %cst_6 : f32 to vector<8x1xf32>
      %c0_7 = arith.constant 0 : index
      %c0_8 = arith.constant 0 : index
      %11 = vector.load %arg3[%c0_7, %c0_8] : memref<8x1xf32, #tpu.memory_space<vmem>>, vector<8x1xf32>
      tpu.vector_store %arg3[%c0_7, %c0_8], %10 {strides = array<i32>} : memref<8x1xf32, #tpu.memory_space<vmem>>, vector<8x1xf32>,
    } else {
    }
    %c0 = arith.constant 0 : index
    %c0_1 = arith.constant 0 : index
    %3 = vector.load %arg2[%c0, %c0_1] : memref<8x256xf32, #tpu.memory_space<vmem>>, vector<8x256xf32>
    %c0_2 = arith.constant 0 : index
    %c0_3 = arith.constant 0 : index
    %4 = vector.load %arg3[%c0_2, %c0_3] : memref<8x1xf32, #tpu.memory_space<vmem>>, vector<8x1xf32>
    %5 = arith.mulf %3, %3 : vector<8x256xf32>
    %cst = arith.constant dense<0.000000e+00> : vector<8xf32>
    %6 = vector.multi_reduction <add>, %5, %cst [1] : vector<8x256xf32> to vector<8xf32>
    %7 = vector.shape_cast %6 : vector<8xf32> to vector<8x1xf32>
    %8 = arith.addf %4, %7 : vector<8x1xf32>
    %c0_4 = arith.constant 0 : index
    %c0_5 = arith.constant 0 : index
    %9 = vector.load %arg3[%c0_4, %c0_5] : memref<8x1xf32, #tpu.memory_space<vmem>>, vector<8x1xf32>
    tpu.vector_store %arg3[%c0_4, %c0_5], %8 {strides = array<i32>} : memref<8x1xf32, #tpu.memory_space<vmem>>, vector<8x1xf32>,
    return
  }
  func.func @transform_0(%arg0: i32, %arg1: i32) -> (i32, i32) {
    %c0_i32 = arith.constant 0 : i32
    return %arg0, %arg1 : i32, i32
  }
  func.func @transform_1(%arg0: i32, %arg1: i32) -> (i32, i32) {
    %c0_i32 = arith.constant 0 : i32
    %c0_i32_0 = arith.constant 0 : i32
    return %arg0, %c0_i32 : i32, i32
  }
}

module attributes {stable_mosaic.version = 11 : i64} {
  func.func @_apply_noise_kernel(%arg0: i32, %arg1: i32, %arg2: memref<8x256xf32, #tpu.memory_space<vmem>>, %arg3: memref<8x256xf32, #tpu.memory_space<vmem>>, %arg4: memref<8x1xf32, #tpu.memory_space<vmem>>, %arg5: memref<8x1xf32, #tpu.memory_space<vmem>>, %arg6: memref<8x256xf32, #tpu.memory_space<vmem>>) attributes {dimension_semantics = [#tpu.dimension_semantics<parallel>, #tpu.dimension_semantics<parallel>], iteration_bounds = array<i64: 1, 1>, scalar_prefetch = 0 : i64, scratch_operands = 0 : i64, tpu.core_type = #tpu.core_type<tc>, window_params = [{transform_indices = @transform_0, window_bounds = array<i64: 8, 256>}, {transform_indices = @transform_1, window_bounds = array<i64: 8, 256>}, {transform_indices = @transform_2, window_bounds = array<i64: 8, 1>}, {transform_indices = @transform_3, window_bounds = array<i64: 8, 1>}, {transform_indices = @transform_4, window_bounds = array<i64: 8, 256>}]} {
    %c0 = arith.constant 0 : index
    %c0_0 = arith.constant 0 : index
    %0 = vector.load %arg2[%c0, %c0_0] : memref<8x256xf32, #tpu.memory_space<vmem>>, vector<8x256xf32>
    %c0_1 = arith.constant 0 : index
    %c0_2 = arith.constant 0 : index
    %1 = vector.load %arg3[%c0_1, %c0_2] : memref<8x256xf32, #tpu.memory_space<vmem>>, vector<8x256xf32>
    %c0_3 = arith.constant 0 : index
    %c0_4 = arith.constant 0 : index
    %2 = vector.load %arg4[%c0_3, %c0_4] : memref<8x1xf32, #tpu.memory_space<vmem>>, vector<8x1xf32>
    %cst = arith.constant 3.906250e-03 : f32
    %3 = vector.broadcast %cst : f32 to vector<8x1xf32>
    %4 = arith.mulf %2, %3 : vector<8x1xf32>
    %5 = math.sqrt %4 : vector<8x1xf32>
    %c0_5 = arith.constant 0 : index
    %c0_6 = arith.constant 0 : index
    %6 = vector.load %arg5[%c0_5, %c0_6] : memref<8x1xf32, #tpu.memory_space<vmem>>, vector<8x1xf32>
    %cst_7 = arith.constant 0.000000e+00 : f32
    %7 = vector.broadcast %cst_7 : f32 to vector<8x1xf32>
    %8 = arith.subf %7, %6 : vector<8x1xf32>
    %cst_8 = arith.constant 0.115129255 : f32
    %9 = vector.broadcast %cst_8 : f32 to vector<8x1xf32>
    %10 = arith.mulf %8, %9 : vector<8x1xf32>
    %11 = math.exp %10 : vector<8x1xf32>
    %12 = arith.mulf %5, %11 : vector<8x1xf32>
    %13 = vector.broadcast %12 : vector<8x1xf32> to vector<8x256xf32>
    %14 = arith.mulf %13, %1 : vector<8x256xf32>
    %15 = arith.addf %0, %14 : vector<8x256xf32>
    %c0_9 = arith.constant 0 : index
    %c0_10 = arith.constant 0 : index
    %16 = vector.load %arg6[%c0_9, %c0_10] : memref<8x256xf32, #tpu.memory_space<vmem>>, vector<8x256xf32>
    tpu.vector_store %arg6[%c0_9, %c0_10], %15 {strides = array<i32>} : memref<8x256xf32, #tpu.memory_space<vmem>>, vector<8x256xf32>,
    return
  }
  func.func @transform_0(%arg0: i32, %arg1: i32) -> (i32, i32) {
    %c0_i32 = arith.constant 0 : i32
    return %arg0, %arg1 : i32, i32
  }
  func.func @transform_1(%arg0: i32, %arg1: i32) -> (i32, i32) {
    %c0_i32 = arith.constant 0 : i32
    return %arg0, %arg1 : i32, i32
  }
  func.func @transform_2(%arg0: i32, %arg1: i32) -> (i32, i32) {
    %c0_i32 = arith.constant 0 : i32
    %c0_i32_0 = arith.constant 0 : i32
    return %arg0, %c0_i32 : i32, i32
  }
  func.func @transform_3(%arg0: i32, %arg1: i32) -> (i32, i32) {
    %c0_i32 = arith.constant 0 : i32
    %c0_i32_0 = arith.constant 0 : i32
    return %arg0, %c0_i32 : i32, i32
  }
  func.func @transform_4(%arg0: i32, %arg1: i32) -> (i32, i32) {
    %c0_i32 = arith.constant 0 : i32
    return %arg0, %arg1 : i32, i32
  }
}

</mosaic_0001>

<llo_original>
// kernel: reverse.2
$region0: #{reverse.2}
  %s0 = inlined_call_operand.vmem [shape: f32[2,63], index: 0, kind: input, shape index: {}]
  %s1 = inlined_call_operand.vmem [shape: f32[2,63], index: 1, kind: output, shape index: {}]
  %v2 = vlaneseq
  %v3 = vsub.s32 62, %v2
  %4 = vset.pattern.permute.xlu0 %v3
  $region1: #{reverse.2} parent=0
    #allocation0 [shape = 'u8[4096]{0}', space=vmem, size = 0x1000, scoped, tag = 'operand span for operand 0']
    #allocation1 [shape = 'u8[1024]{0}', space=vmem, size = 0x400, scoped, tag = 'packed  for operand 0']
    #allocation2 [shape = 'u8[4096]{0}', space=vmem, size = 0x1000, scoped, tag = 'operand span for operand 1']
    #allocation3 [shape = 'u8[1024]{0}', space=vmem, size = 0x400, scoped, tag = 'packed  for operand 1']
    // Predicated region
    $region2: #{reverse.2} parent=1 // pred_check
      _
    $region3: #{reverse.2} parent=1 // pred_check_branch
      %6 = sbr.rel (0) target = $region5
    $region4: #{reverse.2} parent=1 // pred_region
      // Predicated region
      $region6: #{reverse.2} parent=4 // pred_check
        _
      $region7: #{reverse.2} parent=4 // pred_check_branch
        %8 = sbr.rel target = $region9
      $region8: #{reverse.2} parent=4 // pred_region
        // Predicated region
        $region21: #{reverse.2} parent=8 // pred_check
          _
        $region22: #{reverse.2} parent=8 // pred_check_branch
          %24 = sbr.rel (0) target = $region24
        $region23: #{reverse.2} parent=8 // pred_region
          %s26 = ssub.s32 4, 1
          loop: start=0, step=1, limit=1
          $region25: #{reverse.2} parent=23 // loop_pre_header
            _
          $region26: #{reverse.2} parent=23 // loop_header
            %s28 = sphi 0, %s32
            %p29 = scmp.ge.s32.totalorder %s28, 1
            %s33 = sphi %s0, %s0
            %s34 = sphi [#allocation1], [#allocation1]
          $region27: #{reverse.2} parent=23 // loop_header_branch
            %31 = sbr.rel (%p29) target = $region31
          $region28: #{reverse.2} parent=23 // loop_body
            %v35 = vld [vmem:[%s33] sm:%s26]
            %36 = vst [vmem:[%s34] sm:%s26] %v35
          $region29: #{reverse.2} parent=23 // loop_footer
            %s32 = sadd.s32 1, %s28
          $region30: #{reverse.2} parent=23 // loop_footer_branch
            %27 = sbr.rel target = $region26
          $region31: #{reverse.2} parent=23 // loop_exit
            _
        $region24: #{reverse.2} parent=8 // pred_fallthru
          _
      $region9: #{reverse.2} parent=4 // pred_fallthru
        _
      // Predicated region
      $region10: #{reverse.2} parent=4 // pred_check
        _
      $region11: #{reverse.2} parent=4 // pred_check_branch
        %10 = sbr.rel (0) target = $region13
      $region12: #{reverse.2} parent=4 // pred_region
        %s12 = ssub.s32 4, 1
        loop: start=0, step=1, limit=1
        $region14: #{reverse.2} parent=12 // loop_pre_header
          _
        $region15: #{reverse.2} parent=12 // loop_header
          %s14 = sphi 0, %s18
          %p15 = scmp.ge.s32.totalorder %s14, 1
          %s19 = sphi %s0, %s0
          %s20 = sphi [#allocation1], [#allocation1]
        $region16: #{reverse.2} parent=12 // loop_header_branch
          %17 = sbr.rel (%p15) target = $region20
        $region17: #{reverse.2} parent=12 // loop_body
          %v21 = vld [vmem:[%s19] sm:%s12]
          %22 = vst [vmem:[%s20] sm:%s12] %v21
        $region18: #{reverse.2} parent=12 // loop_footer
          %s18 = sadd.s32 1, %s14
        $region19: #{reverse.2} parent=12 // loop_footer_branch
          %13 = sbr.rel target = $region15
        $region20: #{reverse.2} parent=12 // loop_exit
          _
      $region13: #{reverse.2} parent=4 // pred_fallthru
        _
    $region5: #{reverse.2} parent=1 // pred_fallthru
      _
    %37 = vnop
    %s39 = sshll.u32 1, 2
    %s40 = ssub.s32 %s39, 1
    %v41 = vld [vmem:[#allocation1] sm:%s40]
    %42 = vst [vmem:[#allocation0] sm:%s40] %v41
    %v43 = vld [vmem:[#allocation0] sm:$0xff]
    %44 = vperm.xlu0 %4, %v43
    %v45 = vpop.permute.xlu0 %44
    %46 = vst [vmem:[#allocation2] sm:$0xff] %v45
    %s48 = sshll.u32 1, 2
    %s49 = ssub.s32 %s48, 1
    %v51 = vld [vmem:[#allocation2] sm:%s49]
    %s52 = sshll.u32 1, 2
    %s53 = ssub.s32 %s52, 1
    %54 = vst [vmem:[#allocation3] sm:%s53] %v51
    // Predicated region
    $region32: #{reverse.2} parent=1 // pred_check
      _
    $region33: #{reverse.2} parent=1 // pred_check_branch
      %56 = sbr.rel (0) target = $region35
    $region34: #{reverse.2} parent=1 // pred_region
      // Predicated region
      $region36: #{reverse.2} parent=34 // pred_check
        _
      $region37: #{reverse.2} parent=34 // pred_check_branch
        %58 = sbr.rel target = $region39
      $region38: #{reverse.2} parent=34 // pred_region
        // Predicated region
        $region51: #{reverse.2} parent=38 // pred_check
          _
        $region52: #{reverse.2} parent=38 // pred_check_branch
          %74 = sbr.rel (0) target = $region54
        $region53: #{reverse.2} parent=38 // pred_region
          %s76 = ssub.s32 4, 1
          loop: start=0, step=1, limit=1
          $region55: #{reverse.2} parent=53 // loop_pre_header
            _
          $region56: #{reverse.2} parent=53 // loop_header
            %s78 = sphi 0, %s82
            %p79 = scmp.ge.s32.totalorder %s78, 1
            %s83 = sphi [#allocation3], [#allocation3]
            %s84 = sphi %s1, %s1
          $region57: #{reverse.2} parent=53 // loop_header_branch
            %81 = sbr.rel (%p79) target = $region61
          $region58: #{reverse.2} parent=53 // loop_body
            %v85 = vld [vmem:[%s83] sm:%s76]
            %86 = vst [vmem:[%s84] sm:%s76] %v85
          $region59: #{reverse.2} parent=53 // loop_footer
            %s82 = sadd.s32 1, %s78
          $region60: #{reverse.2} parent=53 // loop_footer_branch
            %77 = sbr.rel target = $region56
          $region61: #{reverse.2} parent=53 // loop_exit
            _
        $region54: #{reverse.2} parent=38 // pred_fallthru
          _
      $region39: #{reverse.2} parent=34 // pred_fallthru
        _
      // Predicated region
      $region40: #{reverse.2} parent=34 // pred_check
        _
      $region41: #{reverse.2} parent=34 // pred_check_branch
        %60 = sbr.rel (0) target = $region43
      $region42: #{reverse.2} parent=34 // pred_region
        %s62 = ssub.s32 4, 1
        loop: start=0, step=1, limit=1
        $region44: #{reverse.2} parent=42 // loop_pre_header
          _
        $region45: #{reverse.2} parent=42 // loop_header
          %s64 = sphi 0, %s68
          %p65 = scmp.ge.s32.totalorder %s64, 1
          %s69 = sphi [#allocation3], [#allocation3]
          %s70 = sphi %s1, %s1
        $region46: #{reverse.2} parent=42 // loop_header_branch
          %67 = sbr.rel (%p65) target = $region50
        $region47: #{reverse.2} parent=42 // loop_body
          %v71 = vld [vmem:[%s69] sm:%s62]
          %72 = vst [vmem:[%s70] sm:%s62] %v71
        $region48: #{reverse.2} parent=42 // loop_footer
          %s68 = sadd.s32 1, %s64
        $region49: #{reverse.2} parent=42 // loop_footer_branch
          %63 = sbr.rel target = $region45
        $region50: #{reverse.2} parent=42 // loop_exit
          _
      $region43: #{reverse.2} parent=34 // pred_fallthru
        _
    $region35: #{reverse.2} parent=1 // pred_fallthru
      _
    %87 = vnop

// kernel: _forward.5
$region0: #{_forward.5}
  #allocation0 [shape = 'u32[]', space=smem, size = 0x4, offset = 0x4, fixed_abs, tag = 'smem constant byte address 0x4 - core index']
  #allocation1 [shape = 'u32[144,128]{1,0:T(1,128)}', space=vmem, size = 0x12000, scoped, tag = 'internal scratch']
  %s0 = inlined_call_operand.vmem [shape: f32[8,256], index: 0, kind: input, shape index: {}]
  %s1 = inlined_call_operand.vmem [shape: f32[8,1], index: 1, kind: output, shape index: {}]
  %s2 = sld [smem:[#allocation0]]
  $region18: #{_forward.5} parent=0
    _
  %s4 = ssub.s32 1, %s2
  %s5 = scalar_select 0, %s4, %s2
  // Predicated region
  $region2: #{_forward.5} parent=0 // pred_check
    _
  $region3: #{_forward.5} parent=0 // pred_check_branch
    %7 = sbr.rel (0) target = $region5
  $region4: #{_forward.5} parent=0 // pred_region
    _
  $region5: #{_forward.5} parent=0 // pred_fallthru
    _
  %p8 = scmp.eq.s32.totalorder 0, 0
  // Predicated region
  $region6: #{_forward.5} parent=0 // pred_check
    %p9 = pneg %p8
  $region7: #{_forward.5} parent=0 // pred_check_branch
    %11 = sbr.rel (%p9) target = $region9
  $region8: #{_forward.5} parent=0 // pred_region
    %vm12 = vcmask 7168
    %13 = vst.msk [vmem:[%s1] sm:$0xff] %vm12, 0.0
  $region9: #{_forward.5} parent=0 // pred_fallthru
    _
  %v14 = vld [vmem:[%s0] sm:$0xff]
  %v15 = vld [vmem:[%s0 + $0x8] sm:$0xff]
  %v16 = vld [vmem:[%s1] sm:$0xff]
  %v17 = vmul.f32 %v14, %v14
  %v18 = vmul.f32 %v15, %v15
  %v19 = vadd.f32 %v17, %v18
  %20 = vadd.xlane.f32.xlu0 %v19
  %v21 = vpop.xlane.xlu0 %20
  %v22 = vadd.f32 %v16, %v21
  %vm23 = vcmask 7168
  %24 = vst.msk [vmem:[%s1] sm:$0xff] %vm23, %v22
  // Predicated region
  $region10: #{_forward.5} parent=0 // pred_check
    _
  $region11: #{_forward.5} parent=0 // pred_check_branch
    %26 = sbr.rel (0) target = $region13
  $region12: #{_forward.5} parent=0 // pred_region
    _
  $region13: #{_forward.5} parent=0 // pred_fallthru
    _
  // Predicated region
  $region14: #{_forward.5} parent=0 // pred_check
    _
  $region15: #{_forward.5} parent=0 // pred_check_branch
    %28 = sbr.rel (0) target = $region17
  $region16: #{_forward.5} parent=0 // pred_region
    _
  $region17: #{_forward.5} parent=0 // pred_fallthru
    _

// kernel: _forward.6
$region0: #{_forward.6}
  #allocation0 [shape = 'u32[]', space=smem, size = 0x4, offset = 0x4, fixed_abs, tag = 'smem constant byte address 0x4 - core index']
  #allocation1 [shape = 'u32[144,128]{1,0:T(1,128)}', space=vmem, size = 0x12000, scoped, tag = 'internal scratch']
  %s0 = inlined_call_operand.vmem [shape: f32[8,256], index: 0, kind: input, shape index: {}]
  %s1 = inlined_call_operand.vmem [shape: f32[8,256], index: 1, kind: input, shape index: {}]
  %s2 = inlined_call_operand.vmem [shape: f32[8,1], index: 2, kind: input, shape index: {}]
  %s3 = inlined_call_operand.vmem [shape: f32[8,1], index: 3, kind: input, shape index: {}]
  %s4 = inlined_call_operand.vmem [shape: f32[8,256], index: 4, kind: output, shape index: {}]
  %s5 = sld [smem:[#allocation0]]
  $region26: #{_forward.6} parent=0
    _
  %s7 = ssub.s32 1, %s5
  %s8 = scalar_select 0, %s7, %s5
  // Predicated region
  $region2: #{_forward.6} parent=0 // pred_check
    _
  $region3: #{_forward.6} parent=0 // pred_check_branch
    %10 = sbr.rel (0) target = $region5
  $region4: #{_forward.6} parent=0 // pred_region
    _
  $region5: #{_forward.6} parent=0 // pred_fallthru
    _
  // Predicated region
  $region6: #{_forward.6} parent=0 // pred_check
    _
  $region7: #{_forward.6} parent=0 // pred_check_branch
    %12 = sbr.rel (0) target = $region9
  $region8: #{_forward.6} parent=0 // pred_region
    _
  $region9: #{_forward.6} parent=0 // pred_fallthru
    _
  // Predicated region
  $region10: #{_forward.6} parent=0 // pred_check
    _
  $region11: #{_forward.6} parent=0 // pred_check_branch
    %14 = sbr.rel (0) target = $region13
  $region12: #{_forward.6} parent=0 // pred_region
    _
  $region13: #{_forward.6} parent=0 // pred_fallthru
    _
  // Predicated region
  $region14: #{_forward.6} parent=0 // pred_check
    _
  $region15: #{_forward.6} parent=0 // pred_check_branch
    %16 = sbr.rel (0) target = $region17
  $region16: #{_forward.6} parent=0 // pred_region
    _
  $region17: #{_forward.6} parent=0 // pred_fallthru
    _
  %v17 = vld [vmem:[%s0] sm:$0xff]
  %v18 = vld [vmem:[%s0 + $0x8] sm:$0xff]
  %v19 = vld [vmem:[%s1] sm:$0xff]
  %v20 = vld [vmem:[%s1 + $0x8] sm:$0xff]
  %v21 = vld [vmem:[%s2] sm:$0xff]
  %v22 = vmul.f32 %v21, 0.00390625
  %v23 = vrsqrt.pop %v22
  %v24 = vmul.f32 %v22, %v23
  %vm25 = vcmp.eq.f32.partialorder %v22, inf
  %v26 = vsel %vm25, %v22, %v24
  %vm27 = vcmp.eq.f32.partialorder %v22, 0.0
  %v28 = vand.u32 %v22, 2147483648
  %v29 = vsel %vm27, %v28, %v26
  %v30 = vld [vmem:[%s3] sm:$0xff]
  %v31 = vsub.f32 0.0, %v30
  %v32 = vmul.f32 %v31, 0.115129255
  %v33 = vmul.f32 %v32, 1.442695
  %v34 = vpow.pop %v33
  %v35 = vmul.f32 %v29, %v34
  %37 = vset.pattern.permute.xlu0 0
  %38 = vperm.xlu0 %37, %v35
  %v39 = vpop.permute.xlu0 %38
  %v41 = vmul.f32 %v39, %v19
  %v42 = vmul.f32 %v39, %v20
  %v43 = vadd.f32 %v17, %v41
  %v44 = vadd.f32 %v18, %v42
  %45 = vst [vmem:[%s4] sm:$0xff] %v43
  %46 = vst [vmem:[%s4 + $0x8] sm:$0xff] %v44
  // Predicated region
  $region18: #{_forward.6} parent=0 // pred_check
    _
  $region19: #{_forward.6} parent=0 // pred_check_branch
    %48 = sbr.rel (0) target = $region21
  $region20: #{_forward.6} parent=0 // pred_region
    _
  $region21: #{_forward.6} parent=0 // pred_fallthru
    _
  // Predicated region
  $region22: #{_forward.6} parent=0 // pred_check
    _
  $region23: #{_forward.6} parent=0 // pred_check_branch
    %50 = sbr.rel (0) target = $region25
  $region24: #{_forward.6} parent=0 // pred_region
    _
  $region25: #{_forward.6} parent=0 // pred_fallthru
    _

</llo_original>
